<compile_context>
chip_gen: v6e
topology: v6e:2x2x1
jax: 0.10.0
libtpu: 0.0.40
codegen_flags: <defaults>
</compile_context>

<pallas_src>
import jax
import jax.numpy as jnp
from jax.experimental import pallas as pl
from jax.experimental.pallas import tpu as pltpu


def _round_up(x, m):
    return ((x + m - 1) // m) * m


def _tpu_vmem_capacity_bytes():
    """Physical VMEM per core; conservative 64 MiB fallback if the query fails."""
    try:
        info = pltpu.get_tpu_info()
        return int(getattr(info, "vmem_capacity_bytes", 64 << 20))
    except Exception:
        return 64 << 20


# ----------------------------------------------------------------------------
# Kernel: fused linear + streaming log-softmax + target gather (per token)
#   grid = (n_row_blocks, n_vocab_blocks)   vocab innermost / "arbitrary"
#   output = masked per-token log-prob, shape (R_pad, 1) f32
# ----------------------------------------------------------------------------
def _make_logp_kernel(ignore_index, tile_v, v_real, v_pad, has_bias):
    needs_col_mask = v_pad != v_real

    def kernel(*refs):
        if has_bias:
            x_ref, wt_ref, b_ref, tgt_ref, out_ref, m_sc, l_sc, t_sc = refs
        else:
            x_ref, wt_ref, tgt_ref, out_ref, m_sc, l_sc, t_sc = refs

        j = pl.program_id(1)
        nv = pl.num_programs(1)

        @pl.when(j == 0)
        def _init():
            m_sc[...] = jnp.full_like(m_sc, -jnp.inf)
            l_sc[...] = jnp.zeros_like(l_sc)
            t_sc[...] = jnp.zeros_like(t_sc)

        # Natural (M,K)@(K,N) MXU matmul, f32 accumulation; the weight was
        # pre-transposed once in the wrapper so no in-kernel relayout is needed.
        logits = jnp.dot(x_ref[...], wt_ref[...],
                         preferred_element_type=jnp.float32)       # (rb, tv) f32
        if has_bias:
            # Bias is fully VMEM-resident as (nv, tv); slice this vocab tile's row.
            logits = logits + b_ref[pl.ds(j, 1), :]                # (1, tv) broadcast

        tgt = tgt_ref[...]                                         # (rb, 1) int32
        col = jax.lax.broadcasted_iota(jnp.int32, logits.shape, 1)
        # Gather the target-column logit: out-of-tile (and ignore_index) targets
        # never match the local column range [0, tv).
        hit = col == (tgt - j * tile_v)
        t_sc[...] += jnp.sum(jnp.where(hit, logits, 0.0), axis=-1, keepdims=True)

        if needs_col_mask:
            # Vocab was padded up to a multiple of tile_v: mask padded columns out
            # of the logsumexp (targets are always < v_real, so the gather is safe).
            logits = jnp.where((col + j * tile_v) < v_real, logits, -1e30)

        # Streaming (online) logsumexp over the vocab axis.
        row_max = jnp.max(logits, axis=-1, keepdims=True)
        m_new = jnp.maximum(m_sc[...], row_max)
        l_sc[...] = (l_sc[...] * jnp.exp(m_sc[...] - m_new)
                     + jnp.sum(jnp.exp(logits - m_new), axis=-1, keepdims=True))
        m_sc[...] = m_new

        @pl.when(j == nv - 1)
        def _finalize():
            logz = m_sc[...] + jnp.log(l_sc[...])
            mask = (tgt != ignore_index).astype(jnp.float32)
            out_ref[...] = (t_sc[...] - logz) * mask               # (rb, 1)
            # NOTE: output stays (R_pad, 1); lane-dense (1, rb) output would need an
            # in-kernel (rb,1)->(1,rb) transpose -- writeback here is tiny anyway.

    return kernel


def _fused_masked_token_logp(x, weight, bias, target, ignore_index,
                             *, row_block=None, tile_v=None, compute_dtype=None):
    """Returns masked per-token log-probs, shape (B, T) float32."""
    B, T, H = x.shape
    V, H2 = weight.shape
    assert H == H2, "weight hidden dim mismatch"

    has_bias = bias is not None
    R = B * T

    # bf16 matmul operands (f32 MXU accumulation) when the caller passes f32.
    if compute_dtype is None:
        compute_dtype = jnp.bfloat16 if x.dtype == jnp.float32 else x.dtype
    itemsize = jnp.dtype(compute_dtype).itemsize

    # ---- generation-aware defaults ------------------------------------------
    phys_vmem = _tpu_vmem_capacity_bytes()
    if phys_vmem >= (96 << 20):          # 128-MiB VMEM parts (v5e / v6e, 1 TC)
        vmem_cap = 100 << 20
        rb_default, tv_default = 1024, 1024
        two_tc = False
    else:                                # 64-MiB VMEM parts (v7x, 2 TCs)
        vmem_cap = 52 << 20
        rb_default, tv_default = 512, 512
        two_tc = True
    row_block = rb_default if row_block is None else row_block
    tile_v = tv_default if tile_v is None else tile_v

    # ---- vocab tile (pad V up to the tile; kernel masks padded columns) -----
    tv = max(128, min(_round_up(tile_v, 128), _round_up(V, 128)))

    # ---- row (token) block ---------------------------------------------------
    rb = min(_round_up(row_block, 16), _round_up(R, 16))
    if two_tc and rb >= R and R > 256:
        # Keep >= 2 row blocks so the "parallel" row axis feeds both TensorCores.
        rb = _round_up(-(-R // 2), 16)

    # ---- fit tiles under the VMEM budget -------------------------------------
    headroom = 12 << 20

    def vmem_need(rb_, tv_):
        nv_ = _round_up(V, tv_) // tv_
        return (2 * rb_ * H * itemsize               # activations (double-buffered)
                + 2 * H * tv_ * itemsize             # weight tile (double-buffered)
                + (2 * nv_ * tv_ * 4 if has_bias else 0)   # resident bias
                + 2 * rb_ * 128 * 4                  # targets, lane-padded (rb,1)->(rb,128)
                + 2 * rb_ * 128 * 4                  # output, lane-padded
                + 3 * rb_ * 128 * 4                  # m/l/target-logit scratch, lane-padded
                + 4 * rb_ * tv_ * 4)                 # live (rb,tv) f32 temporaries

    while vmem_need(rb, tv) + headroom > vmem_cap:
        if tv > 256:
            tv = max(128, _round_up(tv // 2, 128))
        elif rb > 256:
            rb = _round_up(rb // 2, 16)
        else:
            break

    V_pad = _round_up(V, tv)
    nv = V_pad // tv
    R_pad = _round_up(R, rb)
    nr = R_pad // rb

    # ---- operand preparation (one-time, fused by XLA with the bf16 cast) -----
    x2 = x.reshape(R, H).astype(compute_dtype)
    w_t = jnp.asarray(weight).astype(compute_dtype).T              # (H, V)
    tgt = jnp.asarray(target, jnp.int32).reshape(R, 1)
    if R_pad != R:
        x2 = jnp.pad(x2, ((0, R_pad - R), (0, 0)))
        tgt = jnp.pad(tgt, ((0, R_pad - R), (0, 0)), constant_values=ignore_index)
    if V_pad != V:
        w_t = jnp.pad(w_t, ((0, 0), (0, V_pad - V)))

    inputs = [x2, w_t]
    in_specs = [
        pl.BlockSpec((rb, H), lambda i, j: (i, 0)),    # activations, reused over vocab
        pl.BlockSpec((H, tv), lambda i, j: (0, j)),    # weight (K, N) tiles: hot stream
    ]
    if has_bias:
        b2 = jnp.asarray(bias, jnp.float32)
        if V_pad != V:
            b2 = jnp.pad(b2, (0, V_pad - V))
        inputs.append(b2.reshape(nv, tv))
        # Constant index_map -> fetched once, stays VMEM-resident for the whole kernel.
        in_specs.append(pl.BlockSpec((nv, tv), lambda i, j: (0, 0)))
    inputs.append(tgt)
    in_specs.append(pl.BlockSpec((rb, 1), lambda i, j: (i, 0)))

    vmem_limit = int(min(max(vmem_need(rb, tv) + headroom, 32 << 20), vmem_cap))

    cost = pl.CostEstimate(
        flops=2 * R_pad * V_pad * H,
        transcendentals=R_pad * V_pad,
        bytes_accessed=(nr * V_pad * H * itemsize + R_pad * H * itemsize
                        + R_pad * 4 + (V_pad * 4 if has_bias else 0)),
    )

    out = pl.pallas_call(
        _make_logp_kernel(ignore_index, tv, V, V_pad, has_bias),
        out_shape=jax.ShapeDtypeStruct((R_pad, 1), jnp.float32),
        grid_spec=pltpu.PrefetchScalarGridSpec(
            num_scalar_prefetch=0,
            grid=(nr, nv),
            in_specs=in_specs,
            out_specs=pl.BlockSpec((rb, 1), lambda i, j: (i, 0)),
            scratch_shapes=[pltpu.VMEM((rb, 1), jnp.float32)] * 3,   # m, l, target-logit
        ),
        compiler_params=pltpu.CompilerParams(
            dimension_semantics=("parallel", "arbitrary"),
            vmem_limit_bytes=vmem_limit),
        cost_estimate=cost,
    )(*inputs)

    return out[:R, 0].reshape(B, T)


def _avg_logp(x, weight, bias, target, ignore_index, **tile_kwargs):
    tok_logp = _fused_masked_token_logp(x, weight, bias, target, ignore_index,
                                        **tile_kwargs)              # (B, T), masked
    mask = (jnp.asarray(target) != ignore_index).astype(jnp.float32)
    return jnp.sum(tok_logp, axis=-1) / jnp.sum(mask, axis=-1)


# ----------------------------------------------------------------------------
# Chunk aggregation identical to the base class (torch.chunk over batch,
# per-chunk losses.mean(), summed) -- vectorized (chunk_size=1 => plain sum).
# ----------------------------------------------------------------------------
def _chunk_aggregate(per_sample, chunk_size):
    B = per_sample.shape[0]
    n_chunks = max(1, B // chunk_size)
    csz = -(-B // n_chunks)                 # ceil, like torch.chunk
    n_full = B // csz
    loss = jnp.sum(jnp.mean(per_sample[: n_full * csz].reshape(n_full, csz), axis=1))
    if n_full * csz < B:                    # uneven tail chunk
        loss = loss + jnp.mean(per_sample[n_full * csz:])
    return loss


class LigerFusedLinearPPOLossPallas:
    """JAX/Pallas equivalent of LigerFusedLinearPPOLoss (forward only)."""
    # TODO(synk): backward pass not implemented (forward-only kernel); `compiled`
    # flag is a no-op (no torch.compile analogue needed in JAX).

    def __init__(self, ignore_index=-100, clip_range=0.2, compiled=True,
                 use_ref_model=False, chunk_size=1):
        self.ignore_index = ignore_index
        self.clip_range = clip_range
        self.compiled = compiled
        self.use_ref_model = use_ref_model
        self.chunk_size = chunk_size

    def __call__(self, _input, lin_weight, target, bias=None, preference_labels=None,
                 ref_input=None, ref_weight=None, ref_bias=None):
        avg_logp = _avg_logp(_input, lin_weight, bias, target, self.ignore_index)
        if self.use_ref_model:
            ref_avg = _avg_logp(ref_input, ref_weight, ref_bias, target,
                                self.ignore_index)
            ratio = jnp.exp(avg_logp - ref_avg)
        else:
            ratio = jnp.exp(avg_logp)
        adv = jnp.where(jnp.asarray(preference_labels).astype(bool), 1.0, -1.0)
        unclipped = ratio * adv
        clipped = jnp.clip(ratio, 1.0 - self.clip_range, 1.0 + self.clip_range) * adv
        losses = -jnp.minimum(unclipped, clipped)
        return _chunk_aggregate(losses, self.chunk_size)


# ----------------------------------------------------------------------------
# Pure-JAX reference (correctness smoke check)
# ----------------------------------------------------------------------------
def _reference_avg_logp(x, w, bias, target, ignore_index, cast_dtype=None):
    if cast_dtype is not None:
        x = x.astype(cast_dtype)
        w = w.astype(cast_dtype)
    logits = jnp.einsum('bth,vh->btv', x.astype(jnp.float32), w.astype(jnp.float32),
                        precision=jax.lax.Precision.HIGHEST)
    if bias is not None:
        logits = logits + bias.astype(jnp.float32)
    lp = jax.nn.log_softmax(logits, axis=-1)
    mask = (target != ignore_index)
    lbl = jnp.where(mask, target, 0)
    per_tok = jnp.take_along_axis(lp, lbl[..., None], axis=-1)[..., 0]
    return jnp.sum(per_tok * mask, axis=-1) / jnp.sum(mask, axis=-1)


def _reference_loss(x, w, target, pref, bias, ref_x, ref_w, ref_b,
                    ignore_index, beta, use_ref_model, chunk_size, cast_dtype=None):
    lp = _reference_avg_logp(x, w, bias, target, ignore_index, cast_dtype)
    if use_ref_model:
        ratio = jnp.exp(lp - _reference_avg_logp(ref_x, ref_w, ref_b, target,
                                                 ignore_index, cast_dtype))
    else:
        ratio = jnp.exp(lp)
    adv = jnp.where(pref, 1.0, -1.0)
    losses = -jnp.minimum(ratio * adv, jnp.clip(ratio, 1.0 - beta, 1.0 + beta) * adv)
    return _chunk_aggregate(losses, chunk_size)


if __name__ == "__main__":
    # Small shapes: B*T=28 exercises row padding; a second config with V=1000 and tiny
    # tiles exercises vocab padding/masking, multi-tile streaming LSE and >1 row block.
    B, T, H, V = 4, 7, 128, 1024
    ignore_index = -100
    bf16 = jnp.bfloat16

    key = jax.random.PRNGKey(0)
    ks = jax.random.split(key, 8)
    x = jax.random.normal(ks[0], (B, T, H), jnp.float32)
    w = jax.random.normal(ks[1], (V, H), jnp.float32) * 0.05
    b = jax.random.normal(ks[2], (V,), jnp.float32) * 0.05
    target = jax.random.randint(ks[3], (B, T), 0, V, jnp.int32)
    target = target.at[:, -2:].set(ignore_index)              # some ignored tokens
    pref = jax.random.bernoulli(ks[4], 0.5, (B,))              # preference labels (bool)
    ref_x = x + 0.1 * jax.random.normal(ks[5], (B, T, H), jnp.float32)
    ref_w = w + 0.01 * jax.random.normal(ks[6], (V, H), jnp.float32)
    ref_b = b

    # Default config (use_ref_model=False, chunk_size=1, clip_range=0.2)
    mod = LigerFusedLinearPPOLossPallas()
    loss = mod(x, w, target, bias=b, preference_labels=pref)

    # Reference-model path
    mod_rm = LigerFusedLinearPPOLossPallas(use_ref_model=True)
    loss_with_ref = mod_rm(x, w, target, bias=b, preference_labels=pref,
                           ref_input=ref_x, ref_weight=ref_w, ref_bias=ref_b)

    # Bias-free path (Liger default) -- exercises the no-bias kernel variant
    mod_nb = LigerFusedLinearPPOLossPallas()
    loss_nb = mod_nb(x, w, target, bias=None, preference_labels=pref)

    # Small-tile / padded-vocab config: V=1000 (not a multiple of 128), tile_v=256
    # (-> 4 vocab tiles, last one partially padded), row_block=16 (-> 2 row blocks).
    V2 = 1000
    w2 = w[:V2]
    b2 = b[:V2]
    target2 = jnp.where(target == ignore_index, ignore_index,
                        jnp.minimum(target, V2 - 1))
    avg_small = _avg_logp(x, w2, b2, target2, ignore_index,
                          row_block=16, tile_v=256)

    jax.block_until_ready((loss, loss_with_ref, loss_nb, avg_small))

    # References: tight check against a bf16-cast/f32-math reference (matches the
    # kernel's compute dtype), loose sanity check against the pure-f32 reference.
    exp_bf = _reference_loss(x, w, target, pref, b, ref_x, ref_w, ref_b,
                             ignore_index, 0.2, False, 1, cast_dtype=bf16)
    exp_f32 = _reference_loss(x, w, target, pref, b, ref_x, ref_w, ref_b,
                              ignore_index, 0.2, False, 1)
    exp_ref_bf = _reference_loss(x, w, target, pref, b, ref_x, ref_w, ref_b,
                                 ignore_index, 0.2, True, 1, cast_dtype=bf16)
    exp_nb_bf = _reference_loss(x, w, target, pref, None, ref_x, ref_w, ref_b,
                                ignore_index, 0.2, False, 1, cast_dtype=bf16)
    exp_avg_small = _reference_avg_logp(x, w2, b2, target2, ignore_index,
                                        cast_dtype=bf16)

    assert jnp.allclose(loss, exp_bf, rtol=3e-3, atol=3e-3), (loss, exp_bf)
    assert jnp.allclose(loss, exp_f32, rtol=3e-2, atol=3e-2), (loss, exp_f32)
    assert jnp.allclose(loss_with_ref, exp_ref_bf, rtol=3e-3, atol=3e-3), (loss_with_ref, exp_ref_bf)
    assert jnp.allclose(loss_nb, exp_nb_bf, rtol=3e-3, atol=3e-3), (loss_nb, exp_nb_bf)
    assert jnp.allclose(avg_small, exp_avg_small, rtol=3e-3, atol=3e-3), (avg_small, exp_avg_small)

    print("KERNEL_OK")
</pallas_src>

<mosaic_0001>
module attributes {stable_mosaic.version = 11 : i64} {
  func.func @kernel(%arg0: i32, %arg1: i32, %arg2: memref<32x128xbf16, #tpu.memory_space<vmem>>, %arg3: memref<128x512xbf16, #tpu.memory_space<vmem>>, %arg4: memref<2x512xf32, #tpu.memory_space<vmem>>, %arg5: memref<32x1xi32, #tpu.memory_space<vmem>>, %arg6: memref<32x1xf32, #tpu.memory_space<vmem>>, %arg7: memref<32x1xf32, #tpu.memory_space<vmem>>, %arg8: memref<32x1xf32, #tpu.memory_space<vmem>>, %arg9: memref<32x1xf32, #tpu.memory_space<vmem>>) attributes {dimension_semantics = [#tpu.dimension_semantics<parallel>, #tpu.dimension_semantics<arbitrary>], iteration_bounds = array<i64: 1, 2>, scalar_prefetch = 0 : i64, scratch_operands = 3 : i64, tpu.core_type = #tpu.core_type<tc>, window_params = [{transform_indices = @transform_0, window_bounds = array<i64: 32, 128>}, {transform_indices = @transform_1, window_bounds = array<i64: 128, 512>}, {pipeline_mode = #tpu.pipeline_mode<synchronous>, transform_indices = @transform_2, window_bounds = array<i64: 2, 512>}, {transform_indices = @transform_3, window_bounds = array<i64: 32, 1>}, {transform_indices = @transform_4, window_bounds = array<i64: 32, 1>}]} {
    %c0_i32 = arith.constant 0 : i32
    %0 = arith.cmpi eq, %arg1, %c0_i32 : i32
    %1 = arith.extui %0 : i1 to i32
    %c0_i32_0 = arith.constant 0 : i32
    %2 = arith.cmpi ne, %1, %c0_i32_0 : i32
    scf.if %2 {
      %cst_26 = arith.constant 0xFF800000 : f32
      %44 = vector.broadcast %cst_26 : f32 to vector<32x1xf32>
      %c0_27 = arith.constant 0 : index
      %c0_28 = arith.constant 0 : index
      %45 = vector.load %arg7[%c0_27, %c0_28] : memref<32x1xf32, #tpu.memory_space<vmem>>, vector<32x1xf32>
      tpu.vector_store %arg7[%c0_27, %c0_28], %44 {strides = array<i32>} : memref<32x1xf32, #tpu.memory_space<vmem>>, vector<32x1xf32>,
      %cst_29 = arith.constant 0.000000e+00 : f32
      %46 = vector.broadcast %cst_29 : f32 to vector<32x1xf32>
      %c0_30 = arith.constant 0 : index
      %c0_31 = arith.constant 0 : index
      %47 = vector.load %arg8[%c0_30, %c0_31] : memref<32x1xf32, #tpu.memory_space<vmem>>, vector<32x1xf32>
      tpu.vector_store %arg8[%c0_30, %c0_31], %46 {strides = array<i32>} : memref<32x1xf32, #tpu.memory_space<vmem>>, vector<32x1xf32>,
      %cst_32 = arith.constant 0.000000e+00 : f32
      %48 = vector.broadcast %cst_32 : f32 to vector<32x1xf32>
      %c0_33 = arith.constant 0 : index
      %c0_34 = arith.constant 0 : index
      %49 = vector.load %arg9[%c0_33, %c0_34] : memref<32x1xf32, #tpu.memory_space<vmem>>, vector<32x1xf32>
      tpu.vector_store %arg9[%c0_33, %c0_34], %48 {strides = array<i32>} : memref<32x1xf32, #tpu.memory_space<vmem>>, vector<32x1xf32>,
    } else {
    }
    %c0 = arith.constant 0 : index
    %c0_1 = arith.constant 0 : index
    %3 = vector.load %arg2[%c0, %c0_1] : memref<32x128xbf16, #tpu.memory_space<vmem>>, vector<32x128xbf16>
    %c0_2 = arith.constant 0 : index
    %c0_3 = arith.constant 0 : index
    %4 = vector.load %arg3[%c0_2, %c0_3] : memref<128x512xbf16, #tpu.memory_space<vmem>>, vector<128x512xbf16>
    %cst = arith.constant dense<0.000000e+00> : vector<32x512xf32>
    %5 = tpu.matmul %3, %4, %cst {dimension_numbers = #tpu.dot_dimension_numbers<[1], [0], [0], [1], [0, 0, 1, 1], [], []>} : vector<32x128xbf16>, vector<128x512xbf16>, vector<32x512xf32> -> vector<32x512xf32>
    %6 = arith.index_cast %arg1 : i32 to index
    %c0_4 = arith.constant 0 : index
    %7 = vector.load %arg4[%6, %c0_4] : memref<2x512xf32, #tpu.memory_space<vmem>>, vector<1x512xf32>
    %8 = vector.broadcast %7 : vector<1x512xf32> to vector<32x512xf32>
    %9 = arith.addf %5, %8 : vector<32x512xf32>
    %c0_5 = arith.constant 0 : index
    %c0_6 = arith.constant 0 : index
    %10 = vector.load %arg5[%c0_5, %c0_6] : memref<32x1xi32, #tpu.memory_space<vmem>>, vector<32x1xi32>
    %11 = tpu.iota {dimensions = array<i32: 1>} : vector<32x512xi32>
    %c512_i32 = arith.constant 512 : i32
    %12 = arith.muli %arg1, %c512_i32 : i32
    %13 = vector.broadcast %12 : i32 to vector<32x1xi32>
    %14 = arith.subi %10, %13 : vector<32x1xi32>
    %15 = vector.broadcast %14 : vector<32x1xi32> to vector<32x512xi32>
    %16 = arith.cmpi eq, %11, %15 : vector<32x512xi32>
    %c0_7 = arith.constant 0 : index
    %c0_8 = arith.constant 0 : index
    %17 = vector.load %arg9[%c0_7, %c0_8] : memref<32x1xf32, #tpu.memory_space<vmem>>, vector<32x1xf32>
    %cst_9 = arith.constant 0.000000e+00 : f32
    %18 = vector.broadcast %cst_9 : f32 to vector<32x512xf32>
    %19 = arith.select %16, %9, %18 : vector<32x512xi1>, vector<32x512xf32>
    %cst_10 = arith.constant dense<0.000000e+00> : vector<32xf32>
    %20 = vector.multi_reduction <add>, %19, %cst_10 [1] : vector<32x512xf32> to vector<32xf32>
    %21 = vector.shape_cast %20 : vector<32xf32> to vector<32x1xf32>
    %22 = arith.addf %17, %21 : vector<32x1xf32>
    %c0_11 = arith.constant 0 : index
    %c0_12 = arith.constant 0 : index
    %23 = vector.load %arg9[%c0_11, %c0_12] : memref<32x1xf32, #tpu.memory_space<vmem>>, vector<32x1xf32>
    tpu.vector_store %arg9[%c0_11, %c0_12], %22 {strides = array<i32>} : memref<32x1xf32, #tpu.memory_space<vmem>>, vector<32x1xf32>,
    %cst_13 = arith.constant dense<0xFF800000> : vector<32xf32>
    %24 = vector.multi_reduction <maximumf>, %9, %cst_13 [1] : vector<32x512xf32> to vector<32xf32>
    %25 = vector.shape_cast %24 : vector<32xf32> to vector<32x1xf32>
    %c0_14 = arith.constant 0 : index
    %c0_15 = arith.constant 0 : index
    %26 = vector.load %arg7[%c0_14, %c0_15] : memref<32x1xf32, #tpu.memory_space<vmem>>, vector<32x1xf32>
    %27 = arith.maximumf %26, %25 : vector<32x1xf32>
    %c0_16 = arith.constant 0 : index
    %c0_17 = arith.constant 0 : index
    %28 = vector.load %arg8[%c0_16, %c0_17] : memref<32x1xf32, #tpu.memory_space<vmem>>, vector<32x1xf32>
    %c0_18 = arith.constant 0 : index
    %c0_19 = arith.constant 0 : index
    %29 = vector.load %arg7[%c0_18, %c0_19] : memref<32x1xf32, #tpu.memory_space<vmem>>, vector<32x1xf32>
    %30 = arith.subf %29, %27 : vector<32x1xf32>
    %31 = math.exp %30 : vector<32x1xf32>
    %32 = arith.mulf %28, %31 : vector<32x1xf32>
    %33 = vector.broadcast %27 : vector<32x1xf32> to vector<32x512xf32>
    %34 = arith.subf %9, %33 : vector<32x512xf32>
    %35 = math.exp %34 : vector<32x512xf32>
    %cst_20 = arith.constant dense<0.000000e+00> : vector<32xf32>
    %36 = vector.multi_reduction <add>, %35, %cst_20 [1] : vector<32x512xf32> to vector<32xf32>
    %37 = vector.shape_cast %36 : vector<32xf32> to vector<32x1xf32>
    %38 = arith.addf %32, %37 : vector<32x1xf32>
    %c0_21 = arith.constant 0 : index
    %c0_22 = arith.constant 0 : index
    %39 = vector.load %arg8[%c0_21, %c0_22] : memref<32x1xf32, #tpu.memory_space<vmem>>, vector<32x1xf32>
    tpu.vector_store %arg8[%c0_21, %c0_22], %38 {strides = array<i32>} : memref<32x1xf32, #tpu.memory_space<vmem>>, vector<32x1xf32>,
    %c0_23 = arith.constant 0 : index
    %c0_24 = arith.constant 0 : index
    %40 = vector.load %arg7[%c0_23, %c0_24] : memref<32x1xf32, #tpu.memory_space<vmem>>, vector<32x1xf32>
    tpu.vector_store %arg7[%c0_23, %c0_24], %27 {strides = array<i32>} : memref<32x1xf32, #tpu.memory_space<vmem>>, vector<32x1xf32>,
    %c1_i32 = arith.constant 1 : i32
    %41 = arith.cmpi eq, %arg1, %c1_i32 : i32
    %42 = arith.extui %41 : i1 to i32
    %c0_i32_25 = arith.constant 0 : i32
    %43 = arith.cmpi ne, %42, %c0_i32_25 : i32
    scf.if %43 {
      %c0_26 = arith.constant 0 : index
      %c0_27 = arith.constant 0 : index
      %44 = vector.load %arg7[%c0_26, %c0_27] : memref<32x1xf32, #tpu.memory_space<vmem>>, vector<32x1xf32>
      %c0_28 = arith.constant 0 : index
      %c0_29 = arith.constant 0 : index
      %45 = vector.load %arg8[%c0_28, %c0_29] : memref<32x1xf32, #tpu.memory_space<vmem>>, vector<32x1xf32>
      %46 = math.log %45 : vector<32x1xf32>
      %47 = arith.addf %44, %46 : vector<32x1xf32>
      %c-100_i32 = arith.constant -100 : i32
      %48 = vector.broadcast %c-100_i32 : i32 to vector<32x1xi32>
      %49 = arith.cmpi ne, %10, %48 : vector<32x1xi32>
      %50 = arith.extui %49 : vector<32x1xi1> to vector<32x1xi32>
      %51 = arith.sitofp %50 : vector<32x1xi32> to vector<32x1xf32>
      %c0_30 = arith.constant 0 : index
      %c0_31 = arith.constant 0 : index
      %52 = vector.load %arg9[%c0_30, %c0_31] : memref<32x1xf32, #tpu.memory_space<vmem>>, vector<32x1xf32>
      %53 = arith.subf %52, %47 : vector<32x1xf32>
      %54 = arith.mulf %53, %51 : vector<32x1xf32>
      %c0_32 = arith.constant 0 : index
      %c0_33 = arith.constant 0 : index
      %55 = vector.load %arg6[%c0_32, %c0_33] : memref<32x1xf32, #tpu.memory_space<vmem>>, vector<32x1xf32>
      tpu.vector_store %arg6[%c0_32, %c0_33], %54 {strides = array<i32>} : memref<32x1xf32, #tpu.memory_space<vmem>>, vector<32x1xf32>,
    } else {
    }
    return
  }
  func.func @transform_0(%arg0: i32, %arg1: i32) -> (i32, i32) {
    %c0_i32 = arith.constant 0 : i32
    %c0_i32_0 = arith.constant 0 : i32
    return %arg0, %c0_i32 : i32, i32
  }
  func.func @transform_1(%arg0: i32, %arg1: i32) -> (i32, i32) {
    %c0_i32 = arith.constant 0 : i32
    %c0_i32_0 = arith.constant 0 : i32
    return %c0_i32, %arg1 : i32, i32
  }
  func.func @transform_2(%arg0: i32, %arg1: i32) -> (i32, i32) {
    %c0_i32 = arith.constant 0 : i32
    %c0_i32_0 = arith.constant 0 : i32
    %c0_i32_1 = arith.constant 0 : i32
    return %c0_i32, %c0_i32_0 : i32, i32
  }
  func.func @transform_3(%arg0: i32, %arg1: i32) -> (i32, i32) {
    %c0_i32 = arith.constant 0 : i32
    %c0_i32_0 = arith.constant 0 : i32
    return %arg0, %c0_i32 : i32, i32
  }
  func.func @transform_4(%arg0: i32, %arg1: i32) -> (i32, i32) {
    %c0_i32 = arith.constant 0 : i32
    %c0_i32_0 = arith.constant 0 : i32
    return %arg0, %c0_i32 : i32, i32
  }
}

</mosaic_0001>

<llo_original>
// kernel: tpu_custom_call.1
$region0: #{tpu_custom_call.1}
  #allocation0 [shape = 'u32[]', space=smem, size = 0x4, offset = 0x4, fixed_abs, tag = 'smem constant byte address 0x4 - core index']
  #allocation1 [shape = 'u32[144,128]{1,0:T(1,128)}', space=vmem, size = 0x12000, scoped, tag = 'internal scratch']
  #allocation2 [shape = 'f32[32,1]{1,0:T(8,128)}', space=vmem, size = 0x4000, scoped, tag = 'scratch operand']
  #allocation3 [shape = 'f32[32,1]{1,0:T(8,128)}', space=vmem, size = 0x4000, scoped, tag = 'scratch operand']
  #allocation4 [shape = 'f32[32,1]{1,0:T(8,128)}', space=vmem, size = 0x4000, scoped, tag = 'scratch operand']
  %s0 = inlined_call_operand.vmem [shape: bf16[32,128], index: 0, kind: input, shape index: {}]
  %s1 = inlined_call_operand.hbm [shape: bf16[128,1024], index: 1, kind: input, shape index: {}]
  %s2 = inlined_call_operand.vmem [shape: f32[2,512], index: 2, kind: input, shape index: {}]
  %s3 = inlined_call_operand.vmem [shape: s32[32,1], index: 3, kind: input, shape index: {}]
  %s4 = inlined_call_operand.vmem [shape: f32[32,1], index: 4, kind: output, shape index: {}]
  %s5 = sld [smem:[#allocation0]]
  $region61: #{tpu_custom_call.1} parent=0
    _
  %s7 = ssub.s32 1, %s5
  %s8 = scalar_select 0, %s7, %s5
  $region1: #{tpu_custom_call.1} parent=0
    #allocation5 [shape = 'u8[262144]{0}', space=vmem, size = 0x40000, scoped, tag = 'input window, operand 1']
    #allocation6 [shape = 's32[2]{0}', space=sflag, size = 0x8, scoped, tag = 'scoped memory for tpu_custom_call.1']
    %9 = vsyncpa [#allocation6], 0
    %s10 = scalar_lea.sflag [#allocation6], 1
    %11 = vsyncpa %s10, 0
    loop: start=0, step=1, limit=4
    $region2: #{tpu_custom_call.1} parent=1 // loop_pre_header
      _
    $region3: #{tpu_custom_call.1} parent=1 // loop_header
      %s13 = sphi 0, %s17
      %p14 = scmp.ge.s32.totalorder %s13, 4
      %s20 = sphi 0, %s32
      %s21 = sphi 0, %s28
      %s22 = sphi 0, %s20
      %s23 = sphi 0, %s21
      %s24 = sphi 0, %s22
      %s25 = sphi 0, %s23
      %s35 = sphi 0, %s37
      %s38 = sphi 0, %s35
      %s39 = sphi 0, %s38
      %s55 = sphi 0, %s39
      %s61 = sphi 0, %s63
      %s64 = sphi 0, %s61
      %s65 = sphi 0, %s64
      %s81 = sphi 0, %s65
      %s85 = sphi 0, %s85
      %s87 = sphi 0, %s85
      %s88 = sphi 0, %s87
      %s102 = sphi 0, %s88
      %s108 = sphi 0, %s110
      %s111 = sphi 0, %s108
      %s112 = sphi 0, %s111
      %s128 = sphi 0, %s112
      %s134 = sphi 0, %s136
      %s137 = sphi 0, %s134
      %s138 = sphi 0, %s137
      %s154 = sphi 0, %s138
    $region4: #{tpu_custom_call.1} parent=1 // loop_header_branch
      %16 = sbr.rel (%p14) target = $region8
    $region5: #{tpu_custom_call.1} parent=1 // loop_body
      %s18 = ssub.s32 %s13, 1
      %s19 = ssub.s32 %s13, 2
      %s26 = sadd.s32 1, %s21
      %p27 = scmp.ge.s32.totalorder %s26, 2
      %s28 = scalar_select %p27, 0, %s26
      %s29 = sadd.s32 1, %s20
      %s30 = scalar_select %p27, %s29, %s20
      %p31 = scmp.ge.s32.totalorder %s30, 1
      %s32 = scalar_select %p31, 0, %s30
      %s33 = ssub.s32 %s20, %s32
      %p34 = scmp.eq.s32.totalorder %s33, 0
      %s36 = sadd.s32 %s35, 1
      %s37 = scalar_select %p34, %s35, %s36
      %p40 = pneg %p34
      %p41 = scmp.eq.s32.totalorder %s13, 1
      %p42 = por %p40, %p41
      %p43 = scmp.ne.s32.totalorder %s35, %s38
      %p44 = scmp.eq.s32.totalorder %s13, 0
      %p45 = por %p43, %p44
      %p46 = scmp.ne.s32.totalorder %s35, %s38
      %p47 = scmp.eq.s32.totalorder %s18, 1
      %p48 = por %p46, %p47
      %p49 = scmp.ne.s32.totalorder %s38, %s39
      %p50 = scmp.eq.s32.totalorder %s18, 0
      %p51 = por %p49, %p50
      %p52 = scmp.ne.s32.totalorder %s38, %s39
      %p53 = scmp.eq.s32.totalorder %s19, 1
      %p54 = por %p52, %p53
      %p56 = scmp.ne.s32.totalorder %s39, %s55
      %p57 = scmp.eq.s32.totalorder %s19, 0
      %p58 = por %p56, %p57
      %s59 = ssub.s32 %s21, %s28
      %p60 = scmp.eq.s32.totalorder %s59, 0
      %s62 = sadd.s32 %s61, 1
      %s63 = scalar_select %p60, %s61, %s62
      %p66 = pneg %p60
      %p67 = scmp.eq.s32.totalorder %s13, 1
      %p68 = por %p66, %p67
      %p69 = scmp.ne.s32.totalorder %s61, %s64
      %p70 = scmp.eq.s32.totalorder %s13, 0
      %p71 = por %p69, %p70
      %p72 = scmp.ne.s32.totalorder %s61, %s64
      %p73 = scmp.eq.s32.totalorder %s18, 1
      %p74 = por %p72, %p73
      %p75 = scmp.ne.s32.totalorder %s64, %s65
      %p76 = scmp.eq.s32.totalorder %s18, 0
      %p77 = por %p75, %p76
      %p78 = scmp.ne.s32.totalorder %s64, %s65
      %p79 = scmp.eq.s32.totalorder %s19, 1
      %p80 = por %p78, %p79
      %p82 = scmp.ne.s32.totalorder %s65, %s81
      %p83 = scmp.eq.s32.totalorder %s19, 0
      %p84 = por %p82, %p83
      %s86 = sadd.s32 %s85, 1
      %p89 = scmp.eq.s32.totalorder %s13, 1
      %p90 = scmp.ne.s32.totalorder %s85, %s87
      %p91 = scmp.eq.s32.totalorder %s13, 0
      %p92 = por %p90, %p91
      %p93 = scmp.ne.s32.totalorder %s85, %s87
      %p94 = scmp.eq.s32.totalorder %s18, 1
      %p95 = por %p93, %p94
      %p96 = scmp.ne.s32.totalorder %s87, %s88
      %p97 = scmp.eq.s32.totalorder %s18, 0
      %p98 = por %p96, %p97
      %p99 = scmp.ne.s32.totalorder %s87, %s88
      %p100 = scmp.eq.s32.totalorder %s19, 1
      %p101 = por %p99, %p100
      %p103 = scmp.ne.s32.totalorder %s88, %s102
      %p104 = scmp.eq.s32.totalorder %s19, 0
      %p105 = por %p103, %p104
      %s106 = ssub.s32 %s20, %s32
      %p107 = scmp.eq.s32.totalorder %s106, 0
      %s109 = sadd.s32 %s108, 1
      %s110 = scalar_select %p107, %s108, %s109
      %p113 = pneg %p107
      %p114 = scmp.eq.s32.totalorder %s13, 1
      %p115 = por %p113, %p114
      %p116 = scmp.ne.s32.totalorder %s108, %s111
      %p117 = scmp.eq.s32.totalorder %s13, 0
      %p118 = por %p116, %p117
      %p119 = scmp.ne.s32.totalorder %s108, %s111
      %p120 = scmp.eq.s32.totalorder %s18, 1
      %p121 = por %p119, %p120
      %p122 = scmp.ne.s32.totalorder %s111, %s112
      %p123 = scmp.eq.s32.totalorder %s18, 0
      %p124 = por %p122, %p123
      %p125 = scmp.ne.s32.totalorder %s111, %s112
      %p126 = scmp.eq.s32.totalorder %s19, 1
      %p127 = por %p125, %p126
      %p129 = scmp.ne.s32.totalorder %s112, %s128
      %p130 = scmp.eq.s32.totalorder %s19, 0
      %p131 = por %p129, %p130
      %s132 = ssub.s32 %s20, %s32
      %p133 = scmp.eq.s32.totalorder %s132, 0
      %s135 = sadd.s32 %s134, 1
      %s136 = scalar_select %p133, %s134, %s135
      %p139 = pneg %p133
      %p140 = scmp.eq.s32.totalorder %s13, 1
      %p141 = por %p139, %p140
      %p142 = scmp.ne.s32.totalorder %s134, %s137
      %p143 = scmp.eq.s32.totalorder %s13, 0
      %p144 = por %p142, %p143
      %p145 = scmp.ne.s32.totalorder %s134, %s137
      %p146 = scmp.eq.s32.totalorder %s18, 1
      %p147 = por %p145, %p146
      %p148 = scmp.ne.s32.totalorder %s137, %s138
      %p149 = scmp.eq.s32.totalorder %s18, 0
      %p150 = por %p148, %p149
      %p151 = scmp.ne.s32.totalorder %s137, %s138
      %p152 = scmp.eq.s32.totalorder %s19, 1
      %p153 = por %p151, %p152
      %p155 = scmp.ne.s32.totalorder %s138, %s154
      %p156 = scmp.eq.s32.totalorder %s19, 0
      %p157 = por %p155, %p156
      %p158 = scmp.le.s32.totalorder 1, %s13
      %p159 = scmp.lt.s32.totalorder %s13, 3
      %p160 = pnand %p158, %p159
      %p161 = pneg %p160
      // Predicated region
      $region9: #{tpu_custom_call.1} parent=5 // pred_check
        _
      $region10: #{tpu_custom_call.1} parent=5 // pred_check_branch
        %163 = sbr.rel (%p160) target = $region12
      $region11: #{tpu_custom_call.1} parent=5 // pred_region
        %s164 = ssub.s32 %s13, 1
        // Predicated region
        $region13: #{tpu_custom_call.1} parent=11 // pred_check
          %p165 = pneg %p51
        $region14: #{tpu_custom_call.1} parent=11 // pred_check_branch
          %167 = sbr.rel (%p165) target = $region16
        $region15: #{tpu_custom_call.1} parent=11 // pred_region
          %s168 = smul.u32 4, %s22
          %p169 = scmp.lt.s32.totalorder %s168, 3
          %s170 = scalar_select %p169, %s168, 3
          %s171 = smul.addr %s170, 4
          %s172 = scalar_lea.vmem %s0, %s171
          %s173 = smul.u32 4, %s22
        $region16: #{tpu_custom_call.1} parent=11 // pred_fallthru
          _
        // Predicated region
        $region17: #{tpu_custom_call.1} parent=11 // pred_check
          %p174 = pneg %p98
        $region18: #{tpu_custom_call.1} parent=11 // pred_check_branch
          %176 = sbr.rel (%p174) target = $region20
        $region19: #{tpu_custom_call.1} parent=11 // pred_region
          _
        $region20: #{tpu_custom_call.1} parent=11 // pred_fallthru
          _
        // Predicated region
        $region21: #{tpu_custom_call.1} parent=11 // pred_check
          %p177 = pneg %p124
        $region22: #{tpu_custom_call.1} parent=11 // pred_check_branch
          %179 = sbr.rel (%p177) target = $region24
        $region23: #{tpu_custom_call.1} parent=11 // pred_region
          %s180 = smul.u32 4, %s22
          %p181 = scmp.lt.s32.totalorder %s180, 3
          %s182 = scalar_select %p181, %s180, 3
          %s183 = smul.addr %s182, 8
          %s184 = scalar_lea.vmem %s3, %s183
          %s185 = smul.u32 4, %s22
        $region24: #{tpu_custom_call.1} parent=11 // pred_fallthru
          _
      $region12: #{tpu_custom_call.1} parent=5 // pred_fallthru
        _
      %p186 = scmp.lt.s32.totalorder %s13, 2
      // Predicated region
      $region25: #{tpu_custom_call.1} parent=5 // pred_check
        %p187 = pneg %p186
      $region26: #{tpu_custom_call.1} parent=5 // pred_check_branch
        %189 = sbr.rel (%p187) target = $region28
      $region27: #{tpu_custom_call.1} parent=5 // pred_region
        // Predicated region
        $region29: #{tpu_custom_call.1} parent=27 // pred_check
          %p190 = pneg %p71
        $region30: #{tpu_custom_call.1} parent=27 // pred_check_branch
          %192 = sbr.rel (%p190) target = $region32
        $region31: #{tpu_custom_call.1} parent=27 // pred_region
          %s193 = sand.u32 %s61, 1
          %s194 = scalar_lea.sflag [#allocation6], %s193
          %s195 = sand.u32 %s61, 1
          %s196 = smul.addr %s195, 256
          %s197 = scalar_lea.vmem [#allocation5], %s196
          %s198 = smul.u32 4, %s21
          %s200 = ssub.s32 4096, 4096
          %201 = vsyncadd %s194, %s200
          %s202 = smul.addr %s198, 64
          %s203 = scalar_lea.hbm %s1, %s202
          %s204 = sshll.u32 %s197, 4
          %s205 = int_to_ptr.vmem [resolvable:$true] %s204
          %210 = dma.hbm_to_vmem [thread:$0]  %s203, 4096, %s205, %s194, 512, 256, 16
        $region32: #{tpu_custom_call.1} parent=27 // pred_fallthru
          _
      $region28: #{tpu_custom_call.1} parent=5 // pred_fallthru
        _
      %p211 = scmp.le.s32.totalorder 1, %s13
      %p212 = scmp.lt.s32.totalorder %s13, 3
      %p213 = pnand %p211, %p212
      %p214 = pneg %p213
      // Predicated region
      $region33: #{tpu_custom_call.1} parent=5 // pred_check
        _
      $region34: #{tpu_custom_call.1} parent=5 // pred_check_branch
        %216 = sbr.rel (%p213) target = $region36
      $region35: #{tpu_custom_call.1} parent=5 // pred_region
        %s217 = ssub.s32 %s13, 1
        %s218 = sand.u32 %s64, 1
        %s219 = scalar_lea.sflag [#allocation6], %s218
        %s220 = sand.u32 %s64, 1
        %s221 = smul.addr %s220, 256
        %s222 = scalar_lea.vmem [#allocation5], %s221
        // Predicated region
        $region37: #{tpu_custom_call.1} parent=35 // pred_check
          %p223 = pneg %p77
        $region38: #{tpu_custom_call.1} parent=35 // pred_check_branch
          %225 = sbr.rel (%p223) target = $region40
        $region39: #{tpu_custom_call.1} parent=35 // pred_region
          %226 = dma.done %s219, 4096
        $region40: #{tpu_custom_call.1} parent=35 // pred_fallthru
          _
        %s227 = smul.u32 4, %s22
        %p228 = scmp.lt.s32.totalorder %s227, 3
        %s229 = scalar_select %p228, %s227, 3
        %s230 = smul.addr %s229, 4
        %s231 = scalar_lea.vmem %s0, %s230
        %p232 = pneg %p51
        %p233 = pneg %p48
        %s234 = sand.u32 %s64, 1
        %s235 = scalar_lea.sflag [#allocation6], %s234
        %s236 = sand.u32 %s64, 1
        %s237 = smul.addr %s236, 256
        %s238 = scalar_lea.vmem [#allocation5], %s237
        %p239 = pneg %p77
        %p240 = pneg %p74
        %p241 = pneg %p98
        %p242 = pneg %p95
        %s243 = smul.u32 4, %s22
        %p244 = scmp.lt.s32.totalorder %s243, 3
        %s245 = scalar_select %p244, %s243, 3
        %s246 = smul.addr %s245, 8
        %s247 = scalar_lea.vmem %s3, %s246
        %p248 = pneg %p124
        %p249 = pneg %p121
        %p250 = pneg %p150
        %p251 = pneg %p147
        %s252 = smul.u32 4, %s22
        %p253 = scmp.lt.s32.totalorder %s252, 3
        %s254 = scalar_select %p253, %s252, 3
        %s255 = smul.addr %s254, 8
        %s256 = scalar_lea.vmem %s4, %s255
        %s257 = smul.u32 4, %s22
        %p258 = scmp.lt.s32.totalorder %s257, 3
        %s259 = scalar_select %p258, %s257, 3
        %s260 = smul.addr %s259, 4
        %s261 = scalar_lea.vmem %s0, %s260
        %s262 = smul.u32 4, %s22
        %s263 = smul.u32 4, %s23
        %s264 = smul.u32 4, %s22
        %p265 = scmp.lt.s32.totalorder %s264, 3
        %s266 = scalar_select %p265, %s264, 3
        %s267 = smul.addr %s266, 8
        %s268 = scalar_lea.vmem %s3, %s267
        %s269 = smul.u32 4, %s22
        %s270 = smul.u32 4, %s22
        %p271 = scmp.lt.s32.totalorder %s270, 3
        %s272 = scalar_select %p271, %s270, 3
        %s273 = smul.addr %s272, 8
        %s274 = scalar_lea.vmem %s4, %s273
        %s275 = smul.u32 4, %s22
        %p277 = scmp.eq.s32.totalorder %s23, 0
        // Predicated region
        $region41: #{tpu_custom_call.1} parent=35 // pred_check
          %p278 = pneg %p277
        $region42: #{tpu_custom_call.1} parent=35 // pred_check_branch
          %280 = sbr.rel (%p278) target = $region44
        $region43: #{tpu_custom_call.1} parent=35 // pred_region
          %vm281 = vcmask 7168
          %282 = vst.msk [vmem:[#allocation2] sm:$0xff] %vm281, -inf
          %283 = vst.msk [vmem:[#allocation2 + $0x8] sm:$0xff] %vm281, -inf
          %284 = vst.msk [vmem:[#allocation2 + $0x10] sm:$0xff] %vm281, -inf
          %285 = vst.msk [vmem:[#allocation2 + $0x18] sm:$0xff] %vm281, -inf
          %286 = vst.msk [vmem:[#allocation3] sm:$0xff] %vm281, 0.0
          %287 = vst.msk [vmem:[#allocation3 + $0x8] sm:$0xff] %vm281, 0.0
          %288 = vst.msk [vmem:[#allocation3 + $0x10] sm:$0xff] %vm281, 0.0
          %289 = vst.msk [vmem:[#allocation3 + $0x18] sm:$0xff] %vm281, 0.0
          %290 = vst.msk [vmem:[#allocation4] sm:$0xff] %vm281, 0.0
          %291 = vst.msk [vmem:[#allocation4 + $0x8] sm:$0xff] %vm281, 0.0
          %292 = vst.msk [vmem:[#allocation4 + $0x10] sm:$0xff] %vm281, 0.0
          %293 = vst.msk [vmem:[#allocation4 + $0x18] sm:$0xff] %vm281, 0.0
        $region44: #{tpu_custom_call.1} parent=35 // pred_fallthru
          _
        %v294 = vld [vmem:[%s261] sm:$0xf]
        %v295 = vld [vmem:[%s261 + $0x4] sm:$0xf]
        %v296 = vld [vmem:[%s261 + $0x8] sm:$0xf]
        %v297 = vld [vmem:[%s261 + $0xc] sm:$0xf]
        %v298 = vld [vmem:[%s222] sm:$0xff]
        %v299 = vld [vmem:[%s222 + $0x8] sm:$0xff]
        %v300 = vld [vmem:[%s222 + $0x10] sm:$0xff]
        %v301 = vld [vmem:[%s222 + $0x18] sm:$0xff]
        %v302 = vld [vmem:[%s222 + $0x20] sm:$0xff]
        %v303 = vld [vmem:[%s222 + $0x28] sm:$0xff]
        %v304 = vld [vmem:[%s222 + $0x30] sm:$0xff]
        %v305 = vld [vmem:[%s222 + $0x38] sm:$0xff]
        %v306 = vld [vmem:[%s222 + $0x40] sm:$0xff]
        %v307 = vld [vmem:[%s222 + $0x48] sm:$0xff]
        %v308 = vld [vmem:[%s222 + $0x50] sm:$0xff]
        %v309 = vld [vmem:[%s222 + $0x58] sm:$0xff]
        %v310 = vld [vmem:[%s222 + $0x60] sm:$0xff]
        %v311 = vld [vmem:[%s222 + $0x68] sm:$0xff]
        %v312 = vld [vmem:[%s222 + $0x70] sm:$0xff]
        %v313 = vld [vmem:[%s222 + $0x78] sm:$0xff]
        %v314 = vld [vmem:[%s222 + $0x80] sm:$0xff]
        %v315 = vld [vmem:[%s222 + $0x88] sm:$0xff]
        %v316 = vld [vmem:[%s222 + $0x90] sm:$0xff]
        %v317 = vld [vmem:[%s222 + $0x98] sm:$0xff]
        %v318 = vld [vmem:[%s222 + $0xa0] sm:$0xff]
        %v319 = vld [vmem:[%s222 + $0xa8] sm:$0xff]
        %v320 = vld [vmem:[%s222 + $0xb0] sm:$0xff]
        %v321 = vld [vmem:[%s222 + $0xb8] sm:$0xff]
        %v322 = vld [vmem:[%s222 + $0xc0] sm:$0xff]
        %v323 = vld [vmem:[%s222 + $0xc8] sm:$0xff]
        %v324 = vld [vmem:[%s222 + $0xd0] sm:$0xff]
        %v325 = vld [vmem:[%s222 + $0xd8] sm:$0xff]
        %v326 = vld [vmem:[%s222 + $0xe0] sm:$0xff]
        %v327 = vld [vmem:[%s222 + $0xe8] sm:$0xff]
        %v328 = vld [vmem:[%s222 + $0xf0] sm:$0xff]
        %v329 = vld [vmem:[%s222 + $0xf8] sm:$0xff]
        %s330 = sshra.s32 %s23, 1
        %s331 = sand.u32 %s23, 1
        %s332 = sshra.s32 %s23, 1
        %s333 = sand.u32 %s23, 1
        %s334 = smul.u32 %s330, 4
        %s335 = smul.u32 %s334, 2
        %s336 = sadd.s32 %s335, %s333
        %s337 = scalar_lea.vmem %s2, %s336
        %v338 = vld [vmem:[%s337] ss:$2 sm:$0xf]
        %v340 = vlaneseq
        %v341 = vshrl.u32 %v340, 7
        %v342 = vsub.s32 0, %v341
        %v343 = vrot.slane %v338, %v342
        %v344 = vlaneseq
        %v345 = vshrl.u32 %v344, 7
        %v346 = vsub.s32 1, %v345
        %v347 = vrot.slane %v338, %v346
        %v348 = vlaneseq
        %v349 = vshrl.u32 %v348, 7
        %v350 = vsub.s32 2, %v349
        %v351 = vrot.slane %v338, %v350
        %v352 = vlaneseq
        %v353 = vshrl.u32 %v352, 7
        %v354 = vsub.s32 3, %v353
        %v355 = vrot.slane %v338, %v354
        %v364 = vunpack.c.l.b16 %v294
        %v365 = vunpack.c.l.b16 %v295
        %v366 = vunpack.c.l.b16 %v296
        %v367 = vunpack.c.l.b16 %v297
        %v368 = vpack.c.b16 %v365, %v364
        %v369 = vpack.c.b16 %v367, %v366
        %v404 = vunpack.c.l.b16 %v298
        %v405 = vunpack.c.h.b16 %v298
        %v406 = vunpack.c.l.b16 %v299
        %v407 = vunpack.c.h.b16 %v299
        %v408 = vunpack.c.l.b16 %v300
        %v409 = vunpack.c.h.b16 %v300
        %v410 = vunpack.c.l.b16 %v301
        %v411 = vunpack.c.h.b16 %v301
        %v412 = vunpack.c.l.b16 %v302
        %v413 = vunpack.c.h.b16 %v302
        %v414 = vunpack.c.l.b16 %v303
        %v415 = vunpack.c.h.b16 %v303
        %v416 = vunpack.c.l.b16 %v304
        %v417 = vunpack.c.h.b16 %v304
        %v418 = vunpack.c.l.b16 %v305
        %v419 = vunpack.c.h.b16 %v305
        %v420 = vunpack.c.l.b16 %v306
        %v421 = vunpack.c.h.b16 %v306
        %v422 = vunpack.c.l.b16 %v307
        %v423 = vunpack.c.h.b16 %v307
        %v424 = vunpack.c.l.b16 %v308
        %v425 = vunpack.c.h.b16 %v308
        %v426 = vunpack.c.l.b16 %v309
        %v427 = vunpack.c.h.b16 %v309
        %v428 = vunpack.c.l.b16 %v310
        %v429 = vunpack.c.h.b16 %v310
        %v430 = vunpack.c.l.b16 %v311
        %v431 = vunpack.c.h.b16 %v311
        %v432 = vunpack.c.l.b16 %v312
        %v433 = vunpack.c.h.b16 %v312
        %v434 = vunpack.c.l.b16 %v313
        %v435 = vunpack.c.h.b16 %v313
        %v436 = vunpack.c.l.b16 %v314
        %v437 = vunpack.c.h.b16 %v314
        %v438 = vunpack.c.l.b16 %v315
        %v439 = vunpack.c.h.b16 %v315
        %v440 = vunpack.c.l.b16 %v316
        %v441 = vunpack.c.h.b16 %v316
        %v442 = vunpack.c.l.b16 %v317
        %v443 = vunpack.c.h.b16 %v317
        %v444 = vunpack.c.l.b16 %v318
        %v445 = vunpack.c.h.b16 %v318
        %v446 = vunpack.c.l.b16 %v319
        %v447 = vunpack.c.h.b16 %v319
        %v448 = vunpack.c.l.b16 %v320
        %v449 = vunpack.c.h.b16 %v320
        %v450 = vunpack.c.l.b16 %v321
        %v451 = vunpack.c.h.b16 %v321
        %v452 = vunpack.c.l.b16 %v322
        %v453 = vunpack.c.h.b16 %v322
        %v454 = vunpack.c.l.b16 %v323
        %v455 = vunpack.c.h.b16 %v323
        %v456 = vunpack.c.l.b16 %v324
        %v457 = vunpack.c.h.b16 %v324
        %v458 = vunpack.c.l.b16 %v325
        %v459 = vunpack.c.h.b16 %v325
        %v460 = vunpack.c.l.b16 %v326
        %v461 = vunpack.c.h.b16 %v326
        %v462 = vunpack.c.l.b16 %v327
        %v463 = vunpack.c.h.b16 %v327
        %v464 = vunpack.c.l.b16 %v328
        %v465 = vunpack.c.h.b16 %v328
        %v466 = vunpack.c.l.b16 %v329
        %v467 = vunpack.c.h.b16 %v329
        %v468 = vpack.c.b16 %v408, %v404
        %v469 = vpack.c.b16 %v409, %v405
        %v470 = vpack.c.b16 %v410, %v406
        %v471 = vpack.c.b16 %v411, %v407
        %v472 = vpack.c.b16 %v416, %v412
        %v473 = vpack.c.b16 %v417, %v413
        %v474 = vpack.c.b16 %v418, %v414
        %v475 = vpack.c.b16 %v419, %v415
        %v476 = vpack.c.b16 %v424, %v420
        %v477 = vpack.c.b16 %v425, %v421
        %v478 = vpack.c.b16 %v426, %v422
        %v479 = vpack.c.b16 %v427, %v423
        %v480 = vpack.c.b16 %v432, %v428
        %v481 = vpack.c.b16 %v433, %v429
        %v482 = vpack.c.b16 %v434, %v430
        %v483 = vpack.c.b16 %v435, %v431
        %v484 = vpack.c.b16 %v440, %v436
        %v485 = vpack.c.b16 %v441, %v437
        %v486 = vpack.c.b16 %v442, %v438
        %v487 = vpack.c.b16 %v443, %v439
        %v488 = vpack.c.b16 %v448, %v444
        %v489 = vpack.c.b16 %v449, %v445
        %v490 = vpack.c.b16 %v450, %v446
        %v491 = vpack.c.b16 %v451, %v447
        %v492 = vpack.c.b16 %v456, %v452
        %v493 = vpack.c.b16 %v457, %v453
        %v494 = vpack.c.b16 %v458, %v454
        %v495 = vpack.c.b16 %v459, %v455
        %v496 = vpack.c.b16 %v464, %v460
        %v497 = vpack.c.b16 %v465, %v461
        %v498 = vpack.c.b16 %v466, %v462
        %v499 = vpack.c.b16 %v467, %v463
        %532 = vmatprep.subr.bf16.mxu0 %v497
        %533 = vmatpush1.bf16.msra.mxu0 %v496
        %534 = vmatprep.subr.bf16.mxu0 %v493
        %535 = vmatpush1.bf16.msra.mxu0 %v492
        %536 = vmatprep.subr.bf16.mxu0 %v489
        %537 = vmatpush1.bf16.msra.mxu0 %v488
        %538 = vmatprep.subr.bf16.mxu0 %v485
        %539 = vmatpush1.bf16.msra.mxu0 %v484
        %540 = vmatprep.subr.bf16.mxu0 %v481
        %541 = vmatpush1.bf16.msra.mxu0 %v480
        %542 = vmatprep.subr.bf16.mxu0 %v477
        %543 = vmatpush1.bf16.msra.mxu0 %v476
        %544 = vmatprep.subr.bf16.mxu0 %v473
        %545 = vmatpush1.bf16.msra.mxu0 %v472
        %546 = vmatprep.subr.bf16.mxu0 %v469
        %547 = vmatpush1.bf16.msra.mxu0 %v468
        %548 = vmatprep.subr.bf16.mxu0 0
        %549 = vmatpush2.bf16.msra.mxu0 0
        %550 = vmatprep.subr.bf16.mxu0 0
        %551 = vmatpush2.bf16.msra.mxu0 0
        %552 = vmatprep.subr.bf16.mxu0 0
        %553 = vmatpush2.bf16.msra.mxu0 0
        %554 = vmatprep.subr.bf16.mxu0 0
        %555 = vmatpush2.bf16.msra.mxu0 0
        %556 = vmatprep.subr.bf16.mxu0 0
        %557 = vmatpush2.bf16.msra.mxu0 0
        %558 = vmatprep.subr.bf16.mxu0 0
        %559 = vmatpush2.bf16.msra.mxu0 0
        %560 = vmatprep.subr.bf16.mxu0 0
        %561 = vmatpush2.bf16.msra.mxu0 0
        %562 = vmatprep.subr.bf16.mxu0 0
        %563 = vmatpush2.bf16.msra.mxu0 0
        %564 = vmatprep.mubr.bf16.mxu0 0
        %565 = vmatmul.mubr.bf16.gmra.mxu0 %v368
        %v566 = vpop.f32.mrf.mxu0
        %v567 = vadd.f32 %v343, %v566
        %v568 = vpop.f32.mrf.mxu0
        %v569 = vadd.f32 %v347, %v568
        %v570 = vpop.f32.mrf.mxu0
        %v571 = vadd.f32 %v343, %v570
        %v572 = vpop.f32.mrf.mxu0
        %v573 = vadd.f32 %v347, %v572
        %574 = vmatprep.mubr.bf16.mxu0 0
        %575 = vmatmul.mubr.bf16.gmra.mxu0 %v369
        %v576 = vpop.f32.mrf.mxu0
        %v577 = vadd.f32 %v343, %v576
        %v578 = vpop.f32.mrf.mxu0
        %v579 = vadd.f32 %v347, %v578
        %v580 = vpop.f32.mrf.mxu0
        %v581 = vadd.f32 %v343, %v580
        %v582 = vpop.f32.mrf.mxu0
        %v583 = vadd.f32 %v347, %v582
        %584 = vdwg.mxu0
        %585 = vmatprep.subr.bf16.mxu0 %v499
        %586 = vmatpush1.bf16.msra.mxu0 %v498
        %587 = vmatprep.subr.bf16.mxu0 %v495
        %588 = vmatpush1.bf16.msra.mxu0 %v494
        %589 = vmatprep.subr.bf16.mxu0 %v491
        %590 = vmatpush1.bf16.msra.mxu0 %v490
        %591 = vmatprep.subr.bf16.mxu0 %v487
        %592 = vmatpush1.bf16.msra.mxu0 %v486
        %593 = vmatprep.subr.bf16.mxu0 %v483
        %594 = vmatpush1.bf16.msra.mxu0 %v482
        %595 = vmatprep.subr.bf16.mxu0 %v479
        %596 = vmatpush1.bf16.msra.mxu0 %v478
        %597 = vmatprep.subr.bf16.mxu0 %v475
        %598 = vmatpush1.bf16.msra.mxu0 %v474
        %599 = vmatprep.subr.bf16.mxu0 %v471
        %600 = vmatpush1.bf16.msra.mxu0 %v470
        %601 = vmatprep.subr.bf16.mxu0 0
        %602 = vmatpush2.bf16.msra.mxu0 0
        %603 = vmatprep.subr.bf16.mxu0 0
        %604 = vmatpush2.bf16.msra.mxu0 0
        %605 = vmatprep.subr.bf16.mxu0 0
        %606 = vmatpush2.bf16.msra.mxu0 0
        %607 = vmatprep.subr.bf16.mxu0 0
        %608 = vmatpush2.bf16.msra.mxu0 0
        %609 = vmatprep.subr.bf16.mxu0 0
        %610 = vmatpush2.bf16.msra.mxu0 0
        %611 = vmatprep.subr.bf16.mxu0 0
        %612 = vmatpush2.bf16.msra.mxu0 0
        %613 = vmatprep.subr.bf16.mxu0 0
        %614 = vmatpush2.bf16.msra.mxu0 0
        %615 = vmatprep.subr.bf16.mxu0 0
        %616 = vmatpush2.bf16.msra.mxu0 0
        %617 = vmatprep.mubr.bf16.mxu0 0
        %618 = vmatmul.mubr.bf16.gmra.mxu0 %v368
        %v619 = vpop.f32.mrf.mxu0
        %v620 = vadd.f32 %v351, %v619
        %v621 = vpop.f32.mrf.mxu0
        %v622 = vadd.f32 %v355, %v621
        %v623 = vpop.f32.mrf.mxu0
        %v624 = vadd.f32 %v351, %v623
        %v625 = vpop.f32.mrf.mxu0
        %v626 = vadd.f32 %v355, %v625
        %627 = vmatprep.mubr.bf16.mxu0 0
        %628 = vmatmul.mubr.bf16.gmra.mxu0 %v369
        %v629 = vpop.f32.mrf.mxu0
        %v630 = vadd.f32 %v351, %v629
        %v631 = vpop.f32.mrf.mxu0
        %v632 = vadd.f32 %v355, %v631
        %v633 = vpop.f32.mrf.mxu0
        %v634 = vadd.f32 %v351, %v633
        %v635 = vpop.f32.mrf.mxu0
        %v636 = vadd.f32 %v355, %v635
        %637 = vdwg.mxu0
        %v638 = vld [vmem:[%s268] sm:$0xff]
        %v639 = vld [vmem:[%s268 + $0x8] sm:$0xff]
        %v640 = vld [vmem:[%s268 + $0x10] sm:$0xff]
        %v641 = vld [vmem:[%s268 + $0x18] sm:$0xff]
        %v642 = vlaneseq
        %v643 = vand.u32 %v642, 127
        %v644 = vadd.s32 %v643, 128
        %v645 = vadd.s32 %v643, 256
        %v646 = vadd.s32 %v643, 384
        %s647 = smul.u32 %s23, 512
        %v648 = vstv %s647
        %v649 = vsub.s32 %v638, %v648
        %v650 = vsub.s32 %v639, %v648
        %v651 = vsub.s32 %v640, %v648
        %v652 = vsub.s32 %v641, %v648
        %653 = vset.pattern.permute.xlu0 0
        %654 = vperm.xlu0 %653, %v649
        %v655 = vpop.permute.xlu0 %654
        %656 = vset.pattern.permute.xlu0 0
        %657 = vperm.xlu0 %656, %v650
        %v658 = vpop.permute.xlu0 %657
        %659 = vset.pattern.permute.xlu0 0
        %660 = vperm.xlu0 %659, %v651
        %v661 = vpop.permute.xlu0 %660
        %662 = vset.pattern.permute.xlu0 0
        %663 = vperm.xlu0 %662, %v652
        %v664 = vpop.permute.xlu0 %663
        %vm665 = vcmp.eq.s32.totalorder %v643, %v655
        %vm666 = vcmp.eq.s32.totalorder %v644, %v655
        %vm667 = vcmp.eq.s32.totalorder %v645, %v655
        %vm668 = vcmp.eq.s32.totalorder %v646, %v655
        %vm669 = vcmp.eq.s32.totalorder %v643, %v658
        %vm670 = vcmp.eq.s32.totalorder %v644, %v658
        %vm671 = vcmp.eq.s32.totalorder %v645, %v658
        %vm672 = vcmp.eq.s32.totalorder %v646, %v658
        %vm673 = vcmp.eq.s32.totalorder %v643, %v661
        %vm674 = vcmp.eq.s32.totalorder %v644, %v661
        %vm675 = vcmp.eq.s32.totalorder %v645, %v661
        %vm676 = vcmp.eq.s32.totalorder %v646, %v661
        %vm677 = vcmp.eq.s32.totalorder %v643, %v664
        %vm678 = vcmp.eq.s32.totalorder %v644, %v664
        %vm679 = vcmp.eq.s32.totalorder %v645, %v664
        %vm680 = vcmp.eq.s32.totalorder %v646, %v664
        %v681 = vld [vmem:[#allocation4] sm:$0xff]
        %v682 = vld [vmem:[#allocation4 + $0x8] sm:$0xff]
        %v683 = vld [vmem:[#allocation4 + $0x10] sm:$0xff]
        %v684 = vld [vmem:[#allocation4 + $0x18] sm:$0xff]
        %v685 = vsel %vm665, %v567, 0.0
        %v686 = vsel %vm666, %v569, 0.0
        %v687 = vsel %vm667, %v620, 0.0
        %v688 = vsel %vm668, %v622, 0.0
        %v689 = vsel %vm669, %v571, 0.0
        %v690 = vsel %vm670, %v573, 0.0
        %v691 = vsel %vm671, %v624, 0.0
        %v692 = vsel %vm672, %v626, 0.0
        %v693 = vsel %vm673, %v577, 0.0
        %v694 = vsel %vm674, %v579, 0.0
        %v695 = vsel %vm675, %v630, 0.0
        %v696 = vsel %vm676, %v632, 0.0
        %v697 = vsel %vm677, %v581, 0.0
        %v698 = vsel %vm678, %v583, 0.0
        %v699 = vsel %vm679, %v634, 0.0
        %v700 = vsel %vm680, %v636, 0.0
        %v701 = vadd.f32 %v685, %v686
        %v702 = vadd.f32 %v701, %v687
        %v703 = vadd.f32 %v702, %v688
        %704 = vadd.xlane.f32.xlu0 %v703
        %v705 = vpop.xlane.xlu0 %704
        %v706 = vadd.f32 %v689, %v690
        %v707 = vadd.f32 %v706, %v691
        %v708 = vadd.f32 %v707, %v692
        %709 = vadd.xlane.f32.xlu0 %v708
        %v710 = vpop.xlane.xlu0 %709
        %v711 = vadd.f32 %v693, %v694
        %v712 = vadd.f32 %v711, %v695
        %v713 = vadd.f32 %v712, %v696
        %714 = vadd.xlane.f32.xlu0 %v713
        %v715 = vpop.xlane.xlu0 %714
        %v716 = vadd.f32 %v697, %v698
        %v717 = vadd.f32 %v716, %v699
        %v718 = vadd.f32 %v717, %v700
        %719 = vadd.xlane.f32.xlu0 %v718
        %v720 = vpop.xlane.xlu0 %719
        %v721 = vadd.f32 %v681, %v705
        %v722 = vadd.f32 %v682, %v710
        %v723 = vadd.f32 %v683, %v715
        %v724 = vadd.f32 %v684, %v720
        %vm725 = vcmask 7168
        %726 = vst.msk [vmem:[#allocation4] sm:$0xff] %vm725, %v721
        %727 = vst.msk [vmem:[#allocation4 + $0x8] sm:$0xff] %vm725, %v722
        %728 = vst.msk [vmem:[#allocation4 + $0x10] sm:$0xff] %vm725, %v723
        %729 = vst.msk [vmem:[#allocation4 + $0x18] sm:$0xff] %vm725, %v724
        %v730 = vmax.f32 %v567, %v569
        %v731 = vmax.f32 %v730, %v620
        %v732 = vmax.f32 %v731, %v622
        %733 = vmax.xlane.f32.xlu0 %v732
        %v734 = vpop.xlane.xlu0 %733
        %v735 = vmax.f32 %v571, %v573
        %v736 = vmax.f32 %v735, %v624
        %v737 = vmax.f32 %v736, %v626
        %738 = vmax.xlane.f32.xlu0 %v737
        %v739 = vpop.xlane.xlu0 %738
        %v740 = vmax.f32 %v577, %v579
        %v741 = vmax.f32 %v740, %v630
        %v742 = vmax.f32 %v741, %v632
        %743 = vmax.xlane.f32.xlu0 %v742
        %v744 = vpop.xlane.xlu0 %743
        %v745 = vmax.f32 %v581, %v583
        %v746 = vmax.f32 %v745, %v634
        %v747 = vmax.f32 %v746, %v636
        %748 = vmax.xlane.f32.xlu0 %v747
        %v749 = vpop.xlane.xlu0 %748
        %v750 = vld [vmem:[#allocation2] sm:$0xff]
        %v751 = vld [vmem:[#allocation2 + $0x8] sm:$0xff]
        %v752 = vld [vmem:[#allocation2 + $0x10] sm:$0xff]
        %v753 = vld [vmem:[#allocation2 + $0x18] sm:$0xff]
        %v754 = vmax.f32 %v750, %v734
        %v755 = vmax.f32 %v751, %v739
        %v756 = vmax.f32 %v752, %v744
        %v757 = vmax.f32 %v753, %v749
        %v758 = vld [vmem:[#allocation3] sm:$0xff]
        %v759 = vld [vmem:[#allocation3 + $0x8] sm:$0xff]
        %v760 = vld [vmem:[#allocation3 + $0x10] sm:$0xff]
        %v761 = vld [vmem:[#allocation3 + $0x18] sm:$0xff]
        %v762 = vsub.f32 %v750, %v754
        %v763 = vsub.f32 %v751, %v755
        %v764 = vsub.f32 %v752, %v756
        %v765 = vsub.f32 %v753, %v757
        %v766 = vmul.f32 %v762, 1.442695
        %v767 = vpow.pop %v766
        %v768 = vmul.f32 %v763, 1.442695
        %v769 = vpow.pop %v768
        %v770 = vmul.f32 %v764, 1.442695
        %v771 = vpow.pop %v770
        %v772 = vmul.f32 %v765, 1.442695
        %v773 = vpow.pop %v772
        %v774 = vmul.f32 %v758, %v767
        %v775 = vmul.f32 %v759, %v769
        %v776 = vmul.f32 %v760, %v771
        %v777 = vmul.f32 %v761, %v773
        %779 = vset.pattern.permute.xlu0 0
        %780 = vperm.xlu0 %779, %v754
        %v781 = vpop.permute.xlu0 %780
        %784 = vset.pattern.permute.xlu0 0
        %785 = vperm.xlu0 %784, %v755
        %v786 = vpop.permute.xlu0 %785
        %789 = vset.pattern.permute.xlu0 0
        %790 = vperm.xlu0 %789, %v756
        %v791 = vpop.permute.xlu0 %790
        %794 = vset.pattern.permute.xlu0 0
        %795 = vperm.xlu0 %794, %v757
        %v796 = vpop.permute.xlu0 %795
        %v798 = vsub.f32 %v567, %v781
        %v799 = vsub.f32 %v569, %v781
        %v800 = vsub.f32 %v620, %v781
        %v801 = vsub.f32 %v622, %v781
        %v802 = vsub.f32 %v571, %v786
        %v803 = vsub.f32 %v573, %v786
        %v804 = vsub.f32 %v624, %v786
        %v805 = vsub.f32 %v626, %v786
        %v806 = vsub.f32 %v577, %v791
        %v807 = vsub.f32 %v579, %v791
        %v808 = vsub.f32 %v630, %v791
        %v809 = vsub.f32 %v632, %v791
        %v810 = vsub.f32 %v581, %v796
        %v811 = vsub.f32 %v583, %v796
        %v812 = vsub.f32 %v634, %v796
        %v813 = vsub.f32 %v636, %v796
        %v814 = vmul.f32 %v798, 1.442695
        %v815 = vpow.pop %v814
        %v816 = vmul.f32 %v799, 1.442695
        %v817 = vpow.pop %v816
        %v818 = vmul.f32 %v800, 1.442695
        %v819 = vpow.pop %v818
        %v820 = vmul.f32 %v801, 1.442695
        %v821 = vpow.pop %v820
        %v822 = vmul.f32 %v802, 1.442695
        %v823 = vpow.pop %v822
        %v824 = vmul.f32 %v803, 1.442695
        %v825 = vpow.pop %v824
        %v826 = vmul.f32 %v804, 1.442695
        %v827 = vpow.pop %v826
        %v828 = vmul.f32 %v805, 1.442695
        %v829 = vpow.pop %v828
        %v830 = vmul.f32 %v806, 1.442695
        %v831 = vpow.pop %v830
        %v832 = vmul.f32 %v807, 1.442695
        %v833 = vpow.pop %v832
        %v834 = vmul.f32 %v808, 1.442695
        %v835 = vpow.pop %v834
        %v836 = vmul.f32 %v809, 1.442695
        %v837 = vpow.pop %v836
        %v838 = vmul.f32 %v810, 1.442695
        %v839 = vpow.pop %v838
        %v840 = vmul.f32 %v811, 1.442695
        %v841 = vpow.pop %v840
        %v842 = vmul.f32 %v812, 1.442695
        %v843 = vpow.pop %v842
        %v844 = vmul.f32 %v813, 1.442695
        %v845 = vpow.pop %v844
        %v846 = vadd.f32 %v815, %v817
        %v847 = vadd.f32 %v846, %v819
        %v848 = vadd.f32 %v847, %v821
        %849 = vadd.xlane.f32.xlu0 %v848
        %v850 = vpop.xlane.xlu0 %849
        %v851 = vadd.f32 %v823, %v825
        %v852 = vadd.f32 %v851, %v827
        %v853 = vadd.f32 %v852, %v829
        %854 = vadd.xlane.f32.xlu0 %v853
        %v855 = vpop.xlane.xlu0 %854
        %v856 = vadd.f32 %v831, %v833
        %v857 = vadd.f32 %v856, %v835
        %v858 = vadd.f32 %v857, %v837
        %859 = vadd.xlane.f32.xlu0 %v858
        %v860 = vpop.xlane.xlu0 %859
        %v861 = vadd.f32 %v839, %v841
        %v862 = vadd.f32 %v861, %v843
        %v863 = vadd.f32 %v862, %v845
        %864 = vadd.xlane.f32.xlu0 %v863
        %v865 = vpop.xlane.xlu0 %864
        %v866 = vadd.f32 %v774, %v850
        %v867 = vadd.f32 %v775, %v855
        %v868 = vadd.f32 %v776, %v860
        %v869 = vadd.f32 %v777, %v865
        %870 = vst.msk [vmem:[#allocation3] sm:$0xff] %vm725, %v866
        %871 = vst.msk [vmem:[#allocation3 + $0x8] sm:$0xff] %vm725, %v867
        %872 = vst.msk [vmem:[#allocation3 + $0x10] sm:$0xff] %vm725, %v868
        %873 = vst.msk [vmem:[#allocation3 + $0x18] sm:$0xff] %vm725, %v869
        %874 = vst.msk [vmem:[#allocation2] sm:$0xff] %vm725, %v754
        %875 = vst.msk [vmem:[#allocation2 + $0x8] sm:$0xff] %vm725, %v755
        %876 = vst.msk [vmem:[#allocation2 + $0x10] sm:$0xff] %vm725, %v756
        %877 = vst.msk [vmem:[#allocation2 + $0x18] sm:$0xff] %vm725, %v757
        %p878 = scmp.eq.s32.totalorder %s23, 1
        // Predicated region
        $region45: #{tpu_custom_call.1} parent=35 // pred_check
          %p879 = pneg %p878
        $region46: #{tpu_custom_call.1} parent=35 // pred_check_branch
          %881 = sbr.rel (%p879) target = $region48
        $region47: #{tpu_custom_call.1} parent=35 // pred_region
          %v882 = vld [vmem:[#allocation2] sm:$0xff]
          %v883 = vld [vmem:[#allocation2 + $0x8] sm:$0xff]
          %v884 = vld [vmem:[#allocation2 + $0x10] sm:$0xff]
          %v885 = vld [vmem:[#allocation2 + $0x18] sm:$0xff]
          %v886 = vld [vmem:[#allocation3] sm:$0xff]
          %v887 = vld [vmem:[#allocation3 + $0x8] sm:$0xff]
          %v888 = vld [vmem:[#allocation3 + $0x10] sm:$0xff]
          %v889 = vld [vmem:[#allocation3 + $0x18] sm:$0xff]
          %v890 = vlog2.pop %v886
          %v891 = vmul.f32 %v890, 0.6931472
          %v892 = vlog2.pop %v887
          %v893 = vmul.f32 %v892, 0.6931472
          %v894 = vlog2.pop %v888
          %v895 = vmul.f32 %v894, 0.6931472
          %v896 = vlog2.pop %v889
          %v897 = vmul.f32 %v896, 0.6931472
          %v898 = vadd.f32 %v882, %v891
          %v899 = vadd.f32 %v883, %v893
          %v900 = vadd.f32 %v884, %v895
          %v901 = vadd.f32 %v885, %v897
          %vm902 = vcmp.ne.s32.totalorder %v638, 4294967196
          %vm903 = vcmp.ne.s32.totalorder %v639, 4294967196
          %vm904 = vcmp.ne.s32.totalorder %v640, 4294967196
          %vm905 = vcmp.ne.s32.totalorder %v641, 4294967196
          %v906 = vsel %vm902, 1, 0
          %v907 = vsel %vm903, 1, 0
          %v908 = vsel %vm904, 1, 0
          %v909 = vsel %vm905, 1, 0
          %v910 = vcvt.s32.f32 %v906
          %v911 = vcvt.s32.f32 %v907
          %v912 = vcvt.s32.f32 %v908
          %v913 = vcvt.s32.f32 %v909
          %v914 = vld [vmem:[#allocation4] sm:$0xff]
          %v915 = vld [vmem:[#allocation4 + $0x8] sm:$0xff]
          %v916 = vld [vmem:[#allocation4 + $0x10] sm:$0xff]
          %v917 = vld [vmem:[#allocation4 + $0x18] sm:$0xff]
          %v918 = vsub.f32 %v914, %v898
          %v919 = vsub.f32 %v915, %v899
          %v920 = vsub.f32 %v916, %v900
          %v921 = vsub.f32 %v917, %v901
          %v922 = vmul.f32 %v918, %v910
          %v923 = vmul.f32 %v919, %v911
          %v924 = vmul.f32 %v920, %v912
          %v925 = vmul.f32 %v921, %v913
          %926 = vst.msk [vmem:[%s274] sm:$0xff] %vm725, %v922
          %927 = vst.msk [vmem:[%s274 + $0x8] sm:$0xff] %vm725, %v923
          %928 = vst.msk [vmem:[%s274 + $0x10] sm:$0xff] %vm725, %v924
          %929 = vst.msk [vmem:[%s274 + $0x18] sm:$0xff] %vm725, %v925
        $region48: #{tpu_custom_call.1} parent=35 // pred_fallthru
          _
        %s930 = smul.u32 4, %s22
        %p931 = scmp.lt.s32.totalorder %s930, 3
        %s932 = scalar_select %p931, %s930, 3
        %s933 = smul.addr %s932, 8
        %s934 = scalar_lea.vmem %s4, %s933
        // Predicated region
        $region49: #{tpu_custom_call.1} parent=35 // pred_check
          %p935 = pneg %p147
        $region50: #{tpu_custom_call.1} parent=35 // pred_check_branch
          %937 = sbr.rel (%p935) target = $region52
        $region51: #{tpu_custom_call.1} parent=35 // pred_region
          %s938 = smul.u32 4, %s22
        $region52: #{tpu_custom_call.1} parent=35 // pred_fallthru
          _
        // Predicated region
        $region53: #{tpu_custom_call.1} parent=35 // pred_check
          %p939 = pneg %p147
        $region54: #{tpu_custom_call.1} parent=35 // pred_check_branch
          %941 = sbr.rel (%p939) target = $region56
        $region55: #{tpu_custom_call.1} parent=35 // pred_region
          %s942 = smul.u32 4, %s22
          %p943 = scmp.lt.s32.totalorder %s942, 3
          %s944 = scalar_select %p943, %s942, 3
          %s945 = smul.addr %s944, 8
          %s946 = scalar_lea.vmem %s4, %s945
        $region56: #{tpu_custom_call.1} parent=35 // pred_fallthru
          _
      $region36: #{tpu_custom_call.1} parent=5 // pred_fallthru
        _
      %p947 = scmp.le.s32.totalorder 2, %s13
      // Predicated region
      $region57: #{tpu_custom_call.1} parent=5 // pred_check
        %p948 = pneg %p947
      $region58: #{tpu_custom_call.1} parent=5 // pred_check_branch
        %950 = sbr.rel (%p948) target = $region60
      $region59: #{tpu_custom_call.1} parent=5 // pred_region
        %s951 = ssub.s32 %s13, 2
      $region60: #{tpu_custom_call.1} parent=5 // pred_fallthru
        _
    $region6: #{tpu_custom_call.1} parent=1 // loop_footer
      %s17 = sadd.s32 1, %s13
    $region7: #{tpu_custom_call.1} parent=1 // loop_footer_branch
      %12 = sbr.rel target = $region3
    $region8: #{tpu_custom_call.1} parent=1 // loop_exit
      _
    %952 = vsyncpa [#allocation6], 1
    %s953 = scalar_lea.sflag [#allocation6], 1
    %954 = vsyncpa %s953, 1

</llo_original>
